<compile_context>
chip_gen: v6e
topology: v6e:2x2x1
jax: 0.10.0
libtpu: 0.0.40
codegen_flags: <defaults>
</compile_context>

<pallas_src>
import functools

import jax
import jax.numpy as jnp
from jax import lax
from jax.experimental import pallas as pl
from jax.experimental.pallas import tpu as pltpu


def _round_up(x, m):
    return ((x + m - 1) // m) * m


def _default_tile_n(n):
    """Sublane-aligned N tile; >=2 grid steps for moderate N (v7x megacore)."""
    if n <= 16:
        return _round_up(max(n, 8), 8)
    # Aim for >= ~8 pipeline steps, capped at 512 rows.
    t = _round_up(pl.cdiv(n, 8), 8)
    t = max(8, min(512, t))
    # Guarantee at least 2 grid steps so both v7x TensorCores get work.
    if pl.cdiv(n, t) < 2:
        t = max(8, _round_up(pl.cdiv(n, 2), 8))
    return t


def _linear_resident_kernel(x_ref, w_ref, b_ref, o_ref, *, k_valid, ragged_k):
    # x_ref: (TN, k_pad)    input tile (may overhang N and K; K tail masked)
    # w_ref: (e_pad, k_pad) full zero-padded weight, resident (constant block)
    # b_ref: (1, e_pad)     zero-padded bias
    # o_ref: (TN, e_pad)    output tile
    x = x_ref[...]
    if ragged_k:
        lane = lax.broadcasted_iota(jnp.int32, x.shape, 1)
        x = jnp.where(lane < k_valid, x, jnp.zeros_like(x))
    acc = lax.dot_general(
        x,
        w_ref[...],
        dimension_numbers=(((1,), (1,)), ((), ())),  # x @ W.T on the MXU
        preferred_element_type=jnp.float32,
    )
    o_ref[...] = (acc + b_ref[...]).astype(o_ref.dtype)


def _linear_ktiled_kernel(x_ref, w_ref, b_ref, o_ref, *, k_valid, tile_k, ragged_k):
    # Output block is resident across the innermost ("arbitrary") K axis and
    # doubles as the f32 accumulator -> no VMEM scratch.
    # TODO(synk): for non-f32 outputs, add an f32 VMEM scratch accumulator.
    k = pl.program_id(1)

    @pl.when(k == 0)
    def _():
        o_ref[...] = jnp.broadcast_to(b_ref[...], o_ref.shape).astype(o_ref.dtype)

    x = x_ref[...]
    if ragged_k:
        lane = k * tile_k + lax.broadcasted_iota(jnp.int32, x.shape, 1)
        x = jnp.where(lane < k_valid, x, jnp.zeros_like(x))
    o_ref[...] += lax.dot_general(
        x,
        w_ref[...],
        dimension_numbers=(((1,), (1,)), ((), ())),
        preferred_element_type=jnp.float32,
    ).astype(o_ref.dtype)


def timing_encoder_forward(inputs, weight, bias, *, tile_n=None, tile_k=None,
                           max_resident_weight_bytes=12 << 20):
    """inputs: (N, input_dim); weight: (encoding_dim, input_dim); bias: (encoding_dim,)."""
    N, K = inputs.shape
    E, Kw = weight.shape
    assert Kw == K, "weight input_dim mismatch"
    assert bias.shape == (E,), "bias shape mismatch"
    out_dtype = inputs.dtype
    itemsize = inputs.dtype.itemsize

    # ---- pad only the (small) weight / bias ---------------------------------
    # Lane-dense E (unmasked vst); 256-aligned when E > 128 (v6e/v7x 256x256 MXU).
    e_pad = 128 if E <= 128 else _round_up(E, 256)
    k_pad = _round_up(K, 128)
    ragged_k = (k_pad != K)

    w_p = weight
    if (e_pad, k_pad) != (E, K):
        w_p = jnp.pad(weight, ((0, e_pad - E), (0, k_pad - K)))
    b_p = bias
    if e_pad != E:
        b_p = jnp.pad(bias, (0, e_pad - E))
    b_p = b_p.reshape(1, e_pad)

    # ---- N tiling (inputs are NOT padded; edge blocks are partial) ----------
    if tile_n is None:
        tile_n = _default_tile_n(N)
    else:
        assert tile_n % 8 == 0, "tile_n must be a multiple of 8 (f32 sublanes)"

    weight_bytes = e_pad * k_pad * w_p.dtype.itemsize
    resident = weight_bytes <= max_resident_weight_bytes

    if resident:
        # ---- fast path: weight fully resident in VMEM, 1-D N grid ----------
        def _fast_vmem(tn):
            return (2 * tn * k_pad * itemsize        # x (double-buffered)
                    + weight_bytes                   # resident weight
                    + 2 * e_pad * 4                  # bias
                    + 2 * tn * e_pad * itemsize)     # out (double-buffered)

        while tile_n > 8 and _fast_vmem(tile_n) > (40 << 20):
            tile_n = max(8, _round_up(tile_n // 2, 8))
        n_tiles = pl.cdiv(N, tile_n)
        vmem_bytes = _fast_vmem(tile_n)

        kernel = functools.partial(_linear_resident_kernel,
                                   k_valid=K, ragged_k=ragged_k)
        grid_spec = pltpu.PrefetchScalarGridSpec(
            num_scalar_prefetch=0,
            grid=(n_tiles,),
            in_specs=[
                pl.BlockSpec((tile_n, k_pad), lambda i: (i, 0)),
                pl.BlockSpec((e_pad, k_pad), lambda i: (0, 0)),   # fetched once
                pl.BlockSpec((1, e_pad), lambda i: (0, 0)),
            ],
            out_specs=pl.BlockSpec((tile_n, e_pad), lambda i: (i, 0)),
        )
        dim_sem = ("parallel",)
        weight_hbm_reads = 1
    else:
        # ---- fallback: K-tiled reduction, output block as f32 accumulator --
        if tile_k is None:
            tile_k = 512 if k_pad % 512 == 0 else (256 if k_pad % 256 == 0 else 128)
        else:
            assert tile_k % 128 == 0 and k_pad % tile_k == 0
        k_tiles = k_pad // tile_k
        n_tiles = pl.cdiv(N, tile_n)
        vmem_bytes = (2 * tile_n * tile_k * itemsize
                      + 2 * e_pad * tile_k * w_p.dtype.itemsize
                      + 2 * e_pad * 4
                      + 2 * tile_n * e_pad * itemsize)

        kernel = functools.partial(_linear_ktiled_kernel,
                                   k_valid=K, tile_k=tile_k, ragged_k=ragged_k)
        grid_spec = pltpu.PrefetchScalarGridSpec(
            num_scalar_prefetch=0,
            grid=(n_tiles, k_tiles),
            in_specs=[
                pl.BlockSpec((tile_n, tile_k), lambda i, k: (i, k)),
                pl.BlockSpec((e_pad, tile_k), lambda i, k: (0, k)),
                pl.BlockSpec((1, e_pad), lambda i, k: (0, 0)),
            ],
            out_specs=pl.BlockSpec((tile_n, e_pad), lambda i, k: (i, 0)),
        )
        dim_sem = ("parallel", "arbitrary")
        weight_hbm_reads = n_tiles  # weight re-streamed once per N tile

    # Cap below v7x's 64 MiB physical VMEM to keep Mosaic headroom.
    vmem_limit = int(min(max(vmem_bytes + (2 << 20), 16 << 20), 56 << 20))

    cost = pl.CostEstimate(
        flops=2 * N * k_pad * e_pad,
        transcendentals=0,
        bytes_accessed=(N * K * itemsize
                        + weight_hbm_reads * weight_bytes
                        + e_pad * 4
                        + N * e_pad * itemsize),
    )

    out_p = pl.pallas_call(
        kernel,
        out_shape=jax.ShapeDtypeStruct((N, e_pad), out_dtype),
        grid_spec=grid_spec,
        compiler_params=pltpu.CompilerParams(
            dimension_semantics=dim_sem,
            vmem_limit_bytes=vmem_limit,
        ),
        cost_estimate=cost,
    )(inputs, w_p, b_p)

    return out_p if e_pad == E else out_p[:, :E]


if __name__ == "__main__":
    key = jax.random.PRNGKey(0)

    # Case 1: small aligned-ish shapes consistent with the module's forward.
    N, input_dim, encoding_dim = 8, 32, 32
    k_x, k_w, k_b, key = jax.random.split(key, 4)
    x = jax.random.normal(k_x, (N, input_dim), dtype=jnp.float32)
    bound = 1.0 / (input_dim ** 0.5)
    W = jax.random.uniform(k_w, (encoding_dim, input_dim), jnp.float32, -bound, bound)
    b = jax.random.uniform(k_b, (encoding_dim,), jnp.float32, -bound, bound)

    out = jax.block_until_ready(timing_encoder_forward(x, W, b))
    ref = x @ W.T + b
    assert out.shape == (N, encoding_dim)
    assert jnp.allclose(out, ref, atol=1e-4, rtol=1e-4), "mismatch vs reference (case 1)"

    # Case 2: ragged shapes — exercises partial N blocks and in-kernel K mask
    # on the weight-resident fast path (no host-side padding of x).
    N2, K2, E2 = 70, 19, 24   # 70 = module's max_length
    k_x2, k_w2, k_b2, key = jax.random.split(key, 4)
    x2 = jax.random.normal(k_x2, (N2, K2), dtype=jnp.float32)
    bound2 = 1.0 / (K2 ** 0.5)
    W2 = jax.random.uniform(k_w2, (E2, K2), jnp.float32, -bound2, bound2)
    b2 = jax.random.uniform(k_b2, (E2,), jnp.float32, -bound2, bound2)

    out2 = jax.block_until_ready(timing_encoder_forward(x2, W2, b2))
    ref2 = x2 @ W2.T + b2
    assert out2.shape == (N2, E2)
    assert jnp.allclose(out2, ref2, atol=1e-4, rtol=1e-4), "mismatch vs reference (case 2)"

    # Case 3: force the K-tiled fallback (weight treated as non-resident) with
    # a ragged contraction dim — exercises the bias-initialized resident-output
    # accumulation and the per-step K mask.
    N3, K3, E3 = 70, 200, 24
    k_x3, k_w3, k_b3, key = jax.random.split(key, 4)
    x3 = jax.random.normal(k_x3, (N3, K3), dtype=jnp.float32)
    bound3 = 1.0 / (K3 ** 0.5)
    W3 = jax.random.uniform(k_w3, (E3, K3), jnp.float32, -bound3, bound3)
    b3 = jax.random.uniform(k_b3, (E3,), jnp.float32, -bound3, bound3)

    out3 = jax.block_until_ready(
        timing_encoder_forward(x3, W3, b3, tile_k=128, max_resident_weight_bytes=0))
    ref3 = x3 @ W3.T + b3
    assert out3.shape == (N3, E3)
    assert jnp.allclose(out3, ref3, atol=1e-4, rtol=1e-4), "mismatch vs reference (case 3)"

    print("KERNEL_OK")
</pallas_src>

<mosaic_0001>
module attributes {stable_mosaic.version = 11 : i64} {
  func.func @_linear_resident_kernel(%arg0: i32, %arg1: memref<8x128xf32, #tpu.memory_space<vmem>>, %arg2: memref<128x128xf32, #tpu.memory_space<vmem>>, %arg3: memref<1x128xf32, #tpu.memory_space<vmem>>, %arg4: memref<8x128xf32, #tpu.memory_space<vmem>>) attributes {dimension_semantics = [#tpu.dimension_semantics<parallel>], iteration_bounds = array<i64: 1>, scalar_prefetch = 0 : i64, scratch_operands = 0 : i64, tpu.core_type = #tpu.core_type<tc>, window_params = [{transform_indices = @transform_0, window_bounds = array<i64: 8, 128>}, {pipeline_mode = #tpu.pipeline_mode<synchronous>, transform_indices = @transform_1, window_bounds = array<i64: 128, 128>}, {pipeline_mode = #tpu.pipeline_mode<synchronous>, transform_indices = @transform_2, window_bounds = array<i64: 1, 128>}, {transform_indices = @transform_3, window_bounds = array<i64: 8, 128>}]} {
    %c0 = arith.constant 0 : index
    %c0_0 = arith.constant 0 : index
    %0 = vector.load %arg1[%c0, %c0_0] : memref<8x128xf32, #tpu.memory_space<vmem>>, vector<8x128xf32>
    %1 = tpu.iota {dimensions = array<i32: 1>} : vector<8x128xi32>
    %c32_i32 = arith.constant 32 : i32
    %2 = vector.broadcast %c32_i32 : i32 to vector<8x128xi32>
    %3 = arith.cmpi slt, %1, %2 : vector<8x128xi32>
    %cst = arith.constant 0.000000e+00 : f32
    %4 = vector.broadcast %cst : f32 to vector<8x128xf32>
    %5 = arith.select %3, %0, %4 : vector<8x128xi1>, vector<8x128xf32>
    %c0_1 = arith.constant 0 : index
    %c0_2 = arith.constant 0 : index
    %6 = vector.load %arg2[%c0_1, %c0_2] : memref<128x128xf32, #tpu.memory_space<vmem>>, vector<128x128xf32>
    %cst_3 = arith.constant dense<0.000000e+00> : vector<8x128xf32>
    %7 = tpu.matmul %5, %6, %cst_3 {dimension_numbers = #tpu.dot_dimension_numbers<[1], [1], [0], [0], [0, 0, 1, 0], [], []>} : vector<8x128xf32>, vector<128x128xf32>, vector<8x128xf32> -> vector<8x128xf32>
    %c0_4 = arith.constant 0 : index
    %c0_5 = arith.constant 0 : index
    %8 = vector.load %arg3[%c0_4, %c0_5] : memref<1x128xf32, #tpu.memory_space<vmem>>, vector<1x128xf32>
    %9 = vector.broadcast %8 : vector<1x128xf32> to vector<8x128xf32>
    %10 = arith.addf %7, %9 : vector<8x128xf32>
    %c0_6 = arith.constant 0 : index
    %c0_7 = arith.constant 0 : index
    %11 = vector.load %arg4[%c0_6, %c0_7] : memref<8x128xf32, #tpu.memory_space<vmem>>, vector<8x128xf32>
    tpu.vector_store %arg4[%c0_6, %c0_7], %10 {strides = array<i32>} : memref<8x128xf32, #tpu.memory_space<vmem>>, vector<8x128xf32>,
    return
  }
  func.func @transform_0(%arg0: i32) -> (i32, i32) {
    %c0_i32 = arith.constant 0 : i32
    %c0_i32_0 = arith.constant 0 : i32
    return %arg0, %c0_i32 : i32, i32
  }
  func.func @transform_1(%arg0: i32) -> (i32, i32) {
    %c0_i32 = arith.constant 0 : i32
    %c0_i32_0 = arith.constant 0 : i32
    %c0_i32_1 = arith.constant 0 : i32
    return %c0_i32, %c0_i32_0 : i32, i32
  }
  func.func @transform_2(%arg0: i32) -> (i32, i32) {
    %c0_i32 = arith.constant 0 : i32
    %c0_i32_0 = arith.constant 0 : i32
    %c0_i32_1 = arith.constant 0 : i32
    return %c0_i32, %c0_i32_0 : i32, i32
  }
  func.func @transform_3(%arg0: i32) -> (i32, i32) {
    %c0_i32 = arith.constant 0 : i32
    %c0_i32_0 = arith.constant 0 : i32
    return %arg0, %c0_i32 : i32, i32
  }
}

</mosaic_0001>

<llo_original>
// kernel: tpu_custom_call.1
$region0: #{tpu_custom_call.1}
  #allocation0 [shape = 'u32[]', space=smem, size = 0x4, offset = 0x4, fixed_abs, tag = 'smem constant byte address 0x4 - core index']
  #allocation1 [shape = 'u32[144,128]{1,0:T(1,128)}', space=vmem, size = 0x12000, scoped, tag = 'internal scratch']
  %s0 = inlined_call_operand.hbm [shape: f32[8,32], index: 0, kind: input, shape index: {}]
  %s1 = inlined_call_operand.hbm [shape: f32[128,128], index: 1, kind: input, shape index: {}]
  %s2 = inlined_call_operand.vmem [shape: f32[1,128], index: 2, kind: input, shape index: {}]
  %s3 = inlined_call_operand.hbm [shape: f32[8,128], index: 3, kind: output, shape index: {}]
  %s4 = sld [smem:[#allocation0]]
  $region30: #{tpu_custom_call.1} parent=0
    _
  %s6 = ssub.s32 1, %s4
  %s7 = scalar_select 0, %s6, %s4
  $region1: #{tpu_custom_call.1} parent=0
    #allocation2 [shape = 'u8[4096]{0}', space=vmem, size = 0x1000, scoped, tag = 'input window, operand 0, single buffered']
    #allocation3 [shape = 's32[1]{0}', space=sflag, size = 0x4, scoped, tag = 'scoped memory for tpu_custom_call.1']
    #allocation4 [shape = 's32[1]{0}', space=sflag, size = 0x4, scoped, tag = 'scoped memory for tpu_custom_call.1']
    #allocation5 [shape = 'u8[65536]{0}', space=vmem, size = 0x10000, scoped, tag = 'input window, operand 1, single buffered']
    #allocation6 [shape = 's32[1]{0}', space=sflag, size = 0x4, scoped, tag = 'scoped memory for tpu_custom_call.1']
    #allocation7 [shape = 'u8[4096]{0}', space=vmem, size = 0x1000, scoped, tag = 'output window, operand 0, single buffered']
    %8 = vsyncpa [#allocation3], 0
    %9 = vsyncpa [#allocation6], 0
    %10 = vsyncpa [#allocation4], 0
    // Predicated region
    $region2: #{tpu_custom_call.1} parent=1 // pred_check
      _
    $region3: #{tpu_custom_call.1} parent=1 // pred_check_branch
      %12 = sbr.rel (0) target = $region5
    $region4: #{tpu_custom_call.1} parent=1 // pred_region
      %s14 = ssub.s32 128, 128
      %15 = vsyncadd [#allocation3], %s14
      %s17 = sshll.u32 [#allocation2], 4
      %s18 = int_to_ptr.vmem [resolvable:$true] %s17
      %20 = dma.hbm_to_vmem [thread:$0]  %s0, 128, %s18, [#allocation3]
    $region5: #{tpu_custom_call.1} parent=1 // pred_fallthru
      _
    // Predicated region
    $region6: #{tpu_custom_call.1} parent=1 // pred_check
      _
    $region7: #{tpu_custom_call.1} parent=1 // pred_check_branch
      %22 = sbr.rel (0) target = $region9
    $region8: #{tpu_custom_call.1} parent=1 // pred_region
      %s24 = ssub.s32 2048, 2048
      %25 = vsyncadd [#allocation6], %s24
      %s26 = sshll.u32 [#allocation5], 4
      %s27 = int_to_ptr.vmem [resolvable:$true] %s26
      %32 = dma.hbm_to_vmem [thread:$0]  %s1, 2048, %s27, [#allocation6], 128, 128, 8
    $region9: #{tpu_custom_call.1} parent=1 // pred_fallthru
      _
    // Predicated region
    $region10: #{tpu_custom_call.1} parent=1 // pred_check
      _
    $region11: #{tpu_custom_call.1} parent=1 // pred_check_branch
      %34 = sbr.rel (0) target = $region13
    $region12: #{tpu_custom_call.1} parent=1 // pred_region
      _
    $region13: #{tpu_custom_call.1} parent=1 // pred_fallthru
      _
    // Predicated region
    $region14: #{tpu_custom_call.1} parent=1 // pred_check
      _
    $region15: #{tpu_custom_call.1} parent=1 // pred_check_branch
      %36 = sbr.rel (0) target = $region17
    $region16: #{tpu_custom_call.1} parent=1 // pred_region
      %37 = dma.done [#allocation3], 128
    $region17: #{tpu_custom_call.1} parent=1 // pred_fallthru
      _
    // Predicated region
    $region18: #{tpu_custom_call.1} parent=1 // pred_check
      _
    $region19: #{tpu_custom_call.1} parent=1 // pred_check_branch
      %39 = sbr.rel (0) target = $region21
    $region20: #{tpu_custom_call.1} parent=1 // pred_region
      %40 = dma.done [#allocation6], 2048
    $region21: #{tpu_custom_call.1} parent=1 // pred_fallthru
      _
    %v41 = vld [vmem:[#allocation2] sm:$0xff]
    %v42 = vlaneseq
    %v43 = vand.u32 %v42, 127
    %vm44 = vcmp.lt.s32.totalorder %v43, 32
    %v45 = vsel %vm44, %v41, 0.0
    %v46 = vld [vmem:[#allocation5] sm:$0xff]
    %v47 = vld [vmem:[#allocation5 + $0x8] sm:$0xff]
    %v48 = vld [vmem:[#allocation5 + $0x10] sm:$0xff]
    %v49 = vld [vmem:[#allocation5 + $0x18] sm:$0xff]
    %v50 = vld [vmem:[#allocation5 + $0x20] sm:$0xff]
    %v51 = vld [vmem:[#allocation5 + $0x28] sm:$0xff]
    %v52 = vld [vmem:[#allocation5 + $0x30] sm:$0xff]
    %v53 = vld [vmem:[#allocation5 + $0x38] sm:$0xff]
    %v54 = vld [vmem:[#allocation5 + $0x40] sm:$0xff]
    %v55 = vld [vmem:[#allocation5 + $0x48] sm:$0xff]
    %v56 = vld [vmem:[#allocation5 + $0x50] sm:$0xff]
    %v57 = vld [vmem:[#allocation5 + $0x58] sm:$0xff]
    %v58 = vld [vmem:[#allocation5 + $0x60] sm:$0xff]
    %v59 = vld [vmem:[#allocation5 + $0x68] sm:$0xff]
    %v60 = vld [vmem:[#allocation5 + $0x70] sm:$0xff]
    %v61 = vld [vmem:[#allocation5 + $0x78] sm:$0xff]
    %v62 = vld [vmem:[%s2] sm:$0x1]
    %v64 = vlaneseq
    %v65 = vshrl.u32 %v64, 7
    %v66 = vsub.s32 0, %v65
    %v67 = vrot.slane %v62, %v66
    %69 = vmatprep.subr.mxu0 0.0
    %70 = vmatpush1.xpose.msra.mxu0 %v61
    %71 = vmatprep.subr.mxu0 0.0
    %72 = vmatpush1.xpose.msra.mxu0 %v60
    %73 = vmatprep.subr.mxu0 0.0
    %74 = vmatpush1.xpose.msra.mxu0 %v59
    %75 = vmatprep.subr.mxu0 0.0
    %76 = vmatpush1.xpose.msra.mxu0 %v58
    %77 = vmatprep.subr.mxu0 0.0
    %78 = vmatpush1.xpose.msra.mxu0 %v57
    %79 = vmatprep.subr.mxu0 0.0
    %80 = vmatpush1.xpose.msra.mxu0 %v56
    %81 = vmatprep.subr.mxu0 0.0
    %82 = vmatpush1.xpose.msra.mxu0 %v55
    %83 = vmatprep.subr.mxu0 0.0
    %84 = vmatpush1.xpose.msra.mxu0 %v54
    %85 = vmatprep.subr.mxu0 0.0
    %86 = vmatpush1.xpose.msra.mxu0 %v53
    %87 = vmatprep.subr.mxu0 0.0
    %88 = vmatpush1.xpose.msra.mxu0 %v52
    %89 = vmatprep.subr.mxu0 0.0
    %90 = vmatpush1.xpose.msra.mxu0 %v51
    %91 = vmatprep.subr.mxu0 0.0
    %92 = vmatpush1.xpose.msra.mxu0 %v50
    %93 = vmatprep.subr.mxu0 0.0
    %94 = vmatpush1.xpose.msra.mxu0 %v49
    %95 = vmatprep.subr.mxu0 0.0
    %96 = vmatpush1.xpose.msra.mxu0 %v48
    %97 = vmatprep.subr.mxu0 0.0
    %98 = vmatpush1.xpose.msra.mxu0 %v47
    %99 = vmatprep.subr.mxu0 0.0
    %100 = vmatpush1.xpose.msra.mxu0 %v46
    %101 = vmatprep.subr.mxu0 0.0
    %102 = vmatpush2.xpose.msra.mxu0 0.0
    %103 = vmatprep.subr.mxu0 0.0
    %104 = vmatpush2.xpose.msra.mxu0 0.0
    %105 = vmatprep.subr.mxu0 0.0
    %106 = vmatpush2.xpose.msra.mxu0 0.0
    %107 = vmatprep.subr.mxu0 0.0
    %108 = vmatpush2.xpose.msra.mxu0 0.0
    %109 = vmatprep.subr.mxu0 0.0
    %110 = vmatpush2.xpose.msra.mxu0 0.0
    %111 = vmatprep.subr.mxu0 0.0
    %112 = vmatpush2.xpose.msra.mxu0 0.0
    %113 = vmatprep.subr.mxu0 0.0
    %114 = vmatpush2.xpose.msra.mxu0 0.0
    %115 = vmatprep.subr.mxu0 0.0
    %116 = vmatpush2.xpose.msra.mxu0 0.0
    %117 = vmatprep.subr.mxu0 0.0
    %118 = vmatpush2.xpose.msra.mxu0 0.0
    %119 = vmatprep.subr.mxu0 0.0
    %120 = vmatpush2.xpose.msra.mxu0 0.0
    %121 = vmatprep.subr.mxu0 0.0
    %122 = vmatpush2.xpose.msra.mxu0 0.0
    %123 = vmatprep.subr.mxu0 0.0
    %124 = vmatpush2.xpose.msra.mxu0 0.0
    %125 = vmatprep.subr.mxu0 0.0
    %126 = vmatpush2.xpose.msra.mxu0 0.0
    %127 = vmatprep.subr.mxu0 0.0
    %128 = vmatpush2.xpose.msra.mxu0 0.0
    %129 = vmatprep.subr.mxu0 0.0
    %130 = vmatpush2.xpose.msra.mxu0 0.0
    %131 = vmatprep.subr.mxu0 0.0
    %132 = vmatpush2.xpose.msra.mxu0 0.0
    %133 = vmatprep.mubr.f32.mxu0 0.0
    %134 = vmatmul.mubr.f32.gmra.mxu0 %v45
    %v135 = vpop.f32.mrf.mxu0
    %v136 = vadd.f32 %v67, %v135
    %v137 = vpop.f32.mrf.mxu0
    %138 = vdwg.mxu0
    %139 = vst [vmem:[#allocation7] sm:$0xff] %v136
    // Predicated region
    $region22: #{tpu_custom_call.1} parent=1 // pred_check
      _
    $region23: #{tpu_custom_call.1} parent=1 // pred_check_branch
      %141 = sbr.rel (0) target = $region25
    $region24: #{tpu_custom_call.1} parent=1 // pred_region
      %s143 = ssub.s32 128, 128
      %144 = vsyncadd [#allocation4], %s143
      %s146 = sshll.u32 [#allocation7], 4
      %s147 = int_to_ptr.vmem [resolvable:$true] %s146
      %149 = dma.vmem_to_hbm [thread:$0]  %s147, 128, %s3, [#allocation4]
    $region25: #{tpu_custom_call.1} parent=1 // pred_fallthru
      _
    // Predicated region
    $region26: #{tpu_custom_call.1} parent=1 // pred_check
      _
    $region27: #{tpu_custom_call.1} parent=1 // pred_check_branch
      %151 = sbr.rel (0) target = $region29
    $region28: #{tpu_custom_call.1} parent=1 // pred_region
      %152 = dma.done [#allocation4], 128
    $region29: #{tpu_custom_call.1} parent=1 // pred_fallthru
      _
    %153 = vsyncpa [#allocation3], 1
    %154 = vsyncpa [#allocation6], 1
    %155 = vsyncpa [#allocation4], 1

</llo_original>
